<compile_context>
chip_gen: v7x
topology: tpu7x:2x2x1
jax: 0.10.0
libtpu: 0.0.40
codegen_flags: <defaults>
</compile_context>

<pallas_src>
import math

import jax
import jax.numpy as jnp
from jax.experimental import pallas as pl
from jax.experimental.pallas import tpu as pltpu


# ---------------------------------------------------------------------------
# Kernels
# ---------------------------------------------------------------------------

def _feat_transform_kernel(feat_ref, w_ref, cj_ref, h_ref, acc_ref):
    """h_tile = ((feat @ W) * cj) for one (src_tile, out_tile) block.

    Grid: (src_tiles, out_tiles, in_tiles); reduction over in_feats is the
    last ("arbitrary") axis, accumulated in the f32 VMEM scratch (output is
    bf16, so a separate f32 accumulator is required here).
    """
    k = pl.program_id(2)

    @pl.when(k == 0)
    def _():
        acc_ref[...] = jnp.zeros_like(acc_ref)

    acc_ref[...] += jnp.dot(
        feat_ref[...], w_ref[...], preferred_element_type=jnp.float32
    )

    @pl.when(k == pl.num_programs(2) - 1)
    def _():
        # cj multiply fused into the finalize (broadcast (TS,1) over TN).
        # TODO(synk): for dropout_rate > 0 mask cj here with
        #             pltpu.prng_random_bits and scale by 1/(1-p).
        h_ref[...] = (acc_ref[...] * cj_ref[...]).astype(h_ref.dtype)


def _aggregate_kernel(adj_ref, h_ref, ci_ref, out_ref):
    """out_tile = ((adj @ h) * ci) for one (dst_tile, out_tile) block.

    Grid: (dst_tiles, out_tiles, src_tiles); the output block index is
    k-invariant, so the f32 out_ref stays resident across the reduction and
    is used directly as the accumulator (no scratch, no finalize copy).
    adj arrives as int8 (0/1) and is widened to bf16 on the VPU.
    """
    k = pl.program_id(2)

    @pl.when(k == 0)
    def _():
        out_ref[...] = jnp.zeros_like(out_ref)

    adj_blk = adj_ref[...].astype(jnp.float32).astype(h_ref.dtype)
    out_ref[...] += jnp.dot(
        adj_blk, h_ref[...], preferred_element_type=jnp.float32
    )

    @pl.when(k == pl.num_programs(2) - 1)
    def _():
        out_ref[...] = out_ref[...] * ci_ref[...]


# ---------------------------------------------------------------------------
# Tiling / padding helpers
# ---------------------------------------------------------------------------

_LANE = 128
# Tile targets: multiples of 256 for the v6e/v7x 256x256 MXU (128 already
# saturates v5e's 4x128x128).  Max VMEM footprint at these tiles is < 10 MiB
# per kernel, comfortably inside v7x's 64 MiB physical VMEM.
_T_ROW = 512     # dst-row / src-row tile target
_T_COL = 512     # out_feats tile target
_T_RED = 1024    # reduction-axis tile target (in_feats / n_src)

_COMPILER_PARAMS = pltpu.CompilerParams(
    dimension_semantics=("parallel", "parallel", "arbitrary"),
    vmem_limit_bytes=48 * 1024 * 1024,   # safe on v7x (64 MiB) and v5e/v6e
)


def _round_up(x, m):
    return ((x + m - 1) // m) * m


def _pick_tile(dim, target, align=_LANE, max_waste=0.125):
    """Pick a 128-aligned tile <= target with bounded zero-padding waste.

    Prefers the largest tile whose extra padding (beyond 128-alignment) is
    <= max_waste of the padded dim; tile=128 (waste 0) is always available.
    """
    dim_aligned = _round_up(max(dim, 1), align)
    target = max(align, min(target, dim_aligned))
    for tile in range(target, 0, -align):
        padded = _round_up(dim_aligned, tile)
        if (padded - dim_aligned) / padded <= max_waste:
            return tile, padded
    return align, dim_aligned


def _divisor_tile(padded, target, align=_LANE):
    """Largest 128-aligned tile <= target that exactly divides `padded`."""
    best = align
    for tile in range(align, min(target, padded) + 1, align):
        if padded % tile == 0:
            best = tile
    return best


def _pad_to(x, target_shape):
    pads = [(0, t - s) for s, t in zip(x.shape, target_shape)]
    if any(p[1] for p in pads):
        return jnp.pad(x, pads)
    return x


# ---------------------------------------------------------------------------
# pallas_call wrappers
# ---------------------------------------------------------------------------

def _feat_transform(feat, weight, cj, ts, tn, tk, out_dtype):
    m, kdim = feat.shape
    n = weight.shape[1]
    grid = (m // ts, n // tn, kdim // tk)
    return pl.pallas_call(
        _feat_transform_kernel,
        out_shape=jax.ShapeDtypeStruct((m, n), out_dtype),
        grid_spec=pltpu.PrefetchScalarGridSpec(
            num_scalar_prefetch=0,
            grid=grid,
            in_specs=[
                pl.BlockSpec((ts, tk), lambda i, j, k: (i, k)),
                pl.BlockSpec((tk, tn), lambda i, j, k: (k, j)),
                pl.BlockSpec((ts, 1), lambda i, j, k: (i, 0)),
            ],
            out_specs=pl.BlockSpec((ts, tn), lambda i, j, k: (i, j)),
            scratch_shapes=[pltpu.VMEM((ts, tn), jnp.float32)],
        ),
        compiler_params=_COMPILER_PARAMS,
    )(feat, weight, cj)


def _aggregate(adj, h, ci, td, tn, ts):
    n_dst, n_src = adj.shape
    n_out = h.shape[1]
    grid = (n_dst // td, n_out // tn, n_src // ts)
    # TODO(synk): sweep pipeline_mode=pl.Buffered(3) on the adj BlockSpec (and
    #             a VMEM-resident h column stripe on v5e/v6e) once measured on
    #             hardware; both are pure-perf knobs.
    return pl.pallas_call(
        _aggregate_kernel,
        out_shape=jax.ShapeDtypeStruct((n_dst, n_out), jnp.float32),
        grid_spec=pltpu.PrefetchScalarGridSpec(
            num_scalar_prefetch=0,
            grid=grid,
            in_specs=[
                pl.BlockSpec((td, ts), lambda i, j, k: (i, k)),
                pl.BlockSpec((ts, tn), lambda i, j, k: (k, j)),
                pl.BlockSpec((td, 1), lambda i, j, k: (i, 0)),
            ],
            out_specs=pl.BlockSpec((td, tn), lambda i, j, k: (i, j)),
        ),
        compiler_params=_COMPILER_PARAMS,
    )(adj, h, ci)


def gcmc_graph_conv(feat, weight, cj, adj, ci, *, compute_dtype=jnp.bfloat16):
    """GCMCGraphConv forward.

    feat : (N_src, in_feats) f32 features, or 1-D int node-id array
           (dot_or_identity identity path -> row gather of `weight`).
    weight : (in_feats, out_feats) f32
    cj : (N_src, 1) f32,  ci : (N_dst, 1) f32
    adj : (N_dst, N_src) dense 0/1 adjacency (row = dst, col = src).
    Returns (N_dst, out_feats) f32.
    """
    # TODO(synk): for realistic sparse graphs replace the dense adjacency
    #             matmul with a CSR/segment-sum kernel (row offsets + column
    #             indices via PrefetchScalarGridSpec scalar prefetch); on v7x
    #             store adj as fp8 (0/1 exact, MXU-native) instead of int8.
    n_dst, n_src = adj.shape
    out_feats = weight.shape[1]

    # Shared tile / padded sizes (N_src and out_feats appear in both kernels).
    t_src_row, n_src_p = _pick_tile(n_src, _T_ROW)
    t_out, out_p = _pick_tile(out_feats, _T_COL)
    t_dst, n_dst_p = _pick_tile(n_dst, _T_ROW)
    # Kernel-2 reduction tile over N_src, decoupled from kernel-1's row tile.
    t_src_red = _divisor_tile(n_src_p, _T_RED)

    # v7x has 2 TensorCores: make sure the parallel (dst, out) grid has >= 2
    # tiles so both get work (harmless on single-TC v5e/v6e).  Halving keeps
    # t_dst a divisor of n_dst_p and a multiple of 32 (int8 sublane packing).
    while (n_dst_p // t_dst) * (out_p // t_out) < 2 and t_dst > 64:
        t_dst //= 2

    if feat.ndim == 1:
        # Identity / embedding-lookup path: no matmul, just gather rows of
        # the weight matrix and apply cj (tiny elementwise op, plain XLA).
        h = jnp.take(weight, feat, axis=0) * cj          # (N_src, out_feats)
        h_p = _pad_to(h.astype(compute_dtype), (n_src_p, out_p))
    else:
        in_feats = feat.shape[1]
        t_in, in_p = _pick_tile(in_feats, _T_RED)
        # Cast to the narrow dtype first, then pad (single narrow-width pass).
        feat_p = _pad_to(feat.astype(compute_dtype), (n_src_p, in_p))
        w_p = _pad_to(weight.astype(compute_dtype), (in_p, out_p))
        cj_p = _pad_to(cj.astype(jnp.float32), (n_src_p, 1))
        h_p = _feat_transform(feat_p, w_p, cj_p, t_src_row, t_out, t_in,
                              compute_dtype)

    # adj is the dominant HBM stream of the memory-bound aggregate kernel:
    # store it as int8 (0/1 exact, half of bf16) and widen in-kernel.
    adj_p = _pad_to(adj.astype(jnp.int8), (n_dst_p, n_src_p))
    ci_p = _pad_to(ci.astype(jnp.float32), (n_dst_p, 1))

    out_padded = _aggregate(adj_p, h_p, ci_p, t_dst, t_out, t_src_red)
    return out_padded[:n_dst, :out_feats]


# ---------------------------------------------------------------------------
# Pure-JAX reference (matches the kernel's bf16 MXU quantization)
# ---------------------------------------------------------------------------

def _reference(feat, weight, cj, adj, ci, compute_dtype=jnp.bfloat16):
    if feat.ndim == 1:
        h = (weight[feat] * cj).astype(compute_dtype)
    else:
        h = (jnp.dot(feat.astype(compute_dtype), weight.astype(compute_dtype),
                     preferred_element_type=jnp.float32) * cj
             ).astype(compute_dtype)
    return jnp.dot(adj.astype(compute_dtype), h,
                   preferred_element_type=jnp.float32) * ci


# ---------------------------------------------------------------------------
# Demo / correctness check
# ---------------------------------------------------------------------------

def xavier_uniform(key, shape, dtype=jnp.float32):
    fan_in, fan_out = shape
    limit = math.sqrt(6.0 / (fan_in + fan_out))
    return jax.random.uniform(key, shape, dtype, minval=-limit, maxval=limit)


if __name__ == "__main__":
    key = jax.random.PRNGKey(0)
    k_feat, k_w, k_adj, k_ids = jax.random.split(key, 4)

    # Small bipartite graph: N_src source nodes -> N_dst destination nodes.
    n_src, n_dst = 48, 24
    in_feats, out_feats = 40, 36

    feat = jax.random.normal(k_feat, (n_src, in_feats), jnp.float32)
    weight = xavier_uniform(k_w, (in_feats, out_feats))

    # Deterministic random 0/1 adjacency (dst x src), ~30% density.
    adj = (jax.random.uniform(k_adj, (n_dst, n_src)) < 0.3).astype(jnp.float32)

    # GCMC-style symmetric normalization constants stored on nodes.
    deg_src = jnp.sum(adj, axis=0, keepdims=True).T    # (n_src, 1) out-degree
    deg_dst = jnp.sum(adj, axis=1, keepdims=True)      # (n_dst, 1) in-degree
    cj = 1.0 / jnp.sqrt(jnp.maximum(deg_src, 1.0))
    ci = 1.0 / jnp.sqrt(jnp.maximum(deg_dst, 1.0))

    # ---- dense-feature path -------------------------------------------------
    out = gcmc_graph_conv(feat, weight, cj, adj, ci)
    out = jax.block_until_ready(out)
    ref = _reference(feat, weight, cj, adj, ci)
    assert out.shape == (n_dst, out_feats)
    assert jnp.allclose(out, ref, atol=2e-2, rtol=2e-2)

    # ---- identity (node-id) path --------------------------------------------
    feat_ids = jax.random.randint(k_ids, (n_src,), 0, in_feats, jnp.int32)
    out_id = gcmc_graph_conv(feat_ids, weight, cj, adj, ci)
    out_id = jax.block_until_ready(out_id)
    ref_id = _reference(feat_ids, weight, cj, adj, ci)
    assert out_id.shape == (n_dst, out_feats)
    assert jnp.allclose(out_id, ref_id, atol=2e-2, rtol=2e-2)

    print("KERNEL_OK")
</pallas_src>

<mosaic_0001>
module attributes {stable_mosaic.version = 11 : i64} {
  func.func @_feat_transform_kernel(%arg0: i32, %arg1: i32, %arg2: i32, %arg3: memref<128x128xbf16, #tpu.memory_space<vmem>>, %arg4: memref<128x128xbf16, #tpu.memory_space<vmem>>, %arg5: memref<128x1xf32, #tpu.memory_space<vmem>>, %arg6: memref<128x128xbf16, #tpu.memory_space<vmem>>, %arg7: memref<128x128xf32, #tpu.memory_space<vmem>>) attributes {dimension_semantics = [#tpu.dimension_semantics<parallel>, #tpu.dimension_semantics<parallel>, #tpu.dimension_semantics<arbitrary>], iteration_bounds = array<i64: 1, 1, 1>, scalar_prefetch = 0 : i64, scratch_operands = 1 : i64, tpu.core_type = #tpu.core_type<tc>, window_params = [{transform_indices = @transform_0, window_bounds = array<i64: 128, 128>}, {transform_indices = @transform_1, window_bounds = array<i64: 128, 128>}, {transform_indices = @transform_2, window_bounds = array<i64: 128, 1>}, {transform_indices = @transform_3, window_bounds = array<i64: 128, 128>}]} {
    %c0_i32 = arith.constant 0 : i32
    %0 = arith.cmpi eq, %arg2, %c0_i32 : i32
    %1 = arith.extui %0 : i1 to i32
    %c0_i32_0 = arith.constant 0 : i32
    %2 = arith.cmpi ne, %1, %c0_i32_0 : i32
    scf.if %2 {
      %cst_10 = arith.constant 0.000000e+00 : f32
      %12 = vector.broadcast %cst_10 : f32 to vector<128x128xf32>
      %c0_11 = arith.constant 0 : index
      %c0_12 = arith.constant 0 : index
      %13 = vector.load %arg7[%c0_11, %c0_12] : memref<128x128xf32, #tpu.memory_space<vmem>>, vector<128x128xf32>
      tpu.vector_store %arg7[%c0_11, %c0_12], %12 {strides = array<i32>} : memref<128x128xf32, #tpu.memory_space<vmem>>, vector<128x128xf32>,
    } else {
    }
    %c0 = arith.constant 0 : index
    %c0_1 = arith.constant 0 : index
    %3 = vector.load %arg7[%c0, %c0_1] : memref<128x128xf32, #tpu.memory_space<vmem>>, vector<128x128xf32>
    %c0_2 = arith.constant 0 : index
    %c0_3 = arith.constant 0 : index
    %4 = vector.load %arg3[%c0_2, %c0_3] : memref<128x128xbf16, #tpu.memory_space<vmem>>, vector<128x128xbf16>
    %c0_4 = arith.constant 0 : index
    %c0_5 = arith.constant 0 : index
    %5 = vector.load %arg4[%c0_4, %c0_5] : memref<128x128xbf16, #tpu.memory_space<vmem>>, vector<128x128xbf16>
    %cst = arith.constant dense<0.000000e+00> : vector<128x128xf32>
    %6 = tpu.matmul %4, %5, %cst {dimension_numbers = #tpu.dot_dimension_numbers<[1], [0], [0], [1], [0, 0, 1, 1], [], []>} : vector<128x128xbf16>, vector<128x128xbf16>, vector<128x128xf32> -> vector<128x128xf32>
    %7 = arith.addf %3, %6 : vector<128x128xf32>
    %c0_6 = arith.constant 0 : index
    %c0_7 = arith.constant 0 : index
    %8 = vector.load %arg7[%c0_6, %c0_7] : memref<128x128xf32, #tpu.memory_space<vmem>>, vector<128x128xf32>
    tpu.vector_store %arg7[%c0_6, %c0_7], %7 {strides = array<i32>} : memref<128x128xf32, #tpu.memory_space<vmem>>, vector<128x128xf32>,
    %c0_i32_8 = arith.constant 0 : i32
    %9 = arith.cmpi eq, %arg2, %c0_i32_8 : i32
    %10 = arith.extui %9 : i1 to i32
    %c0_i32_9 = arith.constant 0 : i32
    %11 = arith.cmpi ne, %10, %c0_i32_9 : i32
    scf.if %11 {
      %c0_10 = arith.constant 0 : index
      %c0_11 = arith.constant 0 : index
      %12 = vector.load %arg7[%c0_10, %c0_11] : memref<128x128xf32, #tpu.memory_space<vmem>>, vector<128x128xf32>
      %c0_12 = arith.constant 0 : index
      %c0_13 = arith.constant 0 : index
      %13 = vector.load %arg5[%c0_12, %c0_13] : memref<128x1xf32, #tpu.memory_space<vmem>>, vector<128x1xf32>
      %14 = vector.broadcast %13 : vector<128x1xf32> to vector<128x128xf32>
      %15 = arith.mulf %12, %14 : vector<128x128xf32>
      %16 = arith.truncf %15 : vector<128x128xf32> to vector<128x128xbf16>
      %c0_14 = arith.constant 0 : index
      %c0_15 = arith.constant 0 : index
      %17 = vector.load %arg6[%c0_14, %c0_15] : memref<128x128xbf16, #tpu.memory_space<vmem>>, vector<128x128xbf16>
      tpu.vector_store %arg6[%c0_14, %c0_15], %16 {strides = array<i32>} : memref<128x128xbf16, #tpu.memory_space<vmem>>, vector<128x128xbf16>,
    } else {
    }
    return
  }
  func.func @transform_0(%arg0: i32, %arg1: i32, %arg2: i32) -> (i32, i32) {
    %c0_i32 = arith.constant 0 : i32
    return %arg0, %arg2 : i32, i32
  }
  func.func @transform_1(%arg0: i32, %arg1: i32, %arg2: i32) -> (i32, i32) {
    %c0_i32 = arith.constant 0 : i32
    return %arg2, %arg1 : i32, i32
  }
  func.func @transform_2(%arg0: i32, %arg1: i32, %arg2: i32) -> (i32, i32) {
    %c0_i32 = arith.constant 0 : i32
    %c0_i32_0 = arith.constant 0 : i32
    return %arg0, %c0_i32 : i32, i32
  }
  func.func @transform_3(%arg0: i32, %arg1: i32, %arg2: i32) -> (i32, i32) {
    %c0_i32 = arith.constant 0 : i32
    return %arg0, %arg1 : i32, i32
  }
}

</mosaic_0001>

<llo_original>
// kernel: tpu_custom_call.1
$region0: #{tpu_custom_call.1}
  #allocation0 [shape = 'u32[]', space=smem, size = 0x4, offset = 0x4, fixed_abs, tag = 'smem constant byte address 0x4 - core index']
  #allocation1 [shape = 'u32[144,128]{1,0:T(1,128)}', space=vmem, size = 0x12000, scoped, tag = 'internal scratch']
  #allocation2 [shape = 'f32[128,128]{1,0:T(8,128)}', space=vmem, size = 0x10000, scoped, tag = 'scratch operand']
  %s0 = inlined_call_operand.vmem [shape: bf16[128,128], index: 0, kind: input, shape index: {}]
  %s1 = inlined_call_operand.vmem [shape: bf16[128,128], index: 1, kind: input, shape index: {}]
  %s2 = inlined_call_operand.vmem [shape: f32[128,1], index: 2, kind: input, shape index: {}]
  %s3 = inlined_call_operand.hbm [shape: bf16[128,128], index: 3, kind: output, shape index: {}]
  %s4 = sld [smem:[#allocation0]]
  $region30: #{tpu_custom_call.1} parent=0
    _
  %s6 = ssub.s32 1, %s4
  %s7 = scalar_select 0, %s6, %s4
  $region1: #{tpu_custom_call.1} parent=0
    #allocation3 [shape = 'u8[32768]{0}', space=vmem, size = 0x8000, scoped, tag = 'output window, operand 0, single buffered']
    #allocation4 [shape = 's32[1]{0}', space=sflag, size = 0x4, scoped, tag = 'scoped memory for tpu_custom_call.1']
    %8 = vsyncpa [#allocation4], 0
    // Predicated region
    $region2: #{tpu_custom_call.1} parent=1 // pred_check
      _
    $region3: #{tpu_custom_call.1} parent=1 // pred_check_branch
      %10 = sbr.rel (0) target = $region5
    $region4: #{tpu_custom_call.1} parent=1 // pred_region
      _
    $region5: #{tpu_custom_call.1} parent=1 // pred_fallthru
      _
    // Predicated region
    $region6: #{tpu_custom_call.1} parent=1 // pred_check
      _
    $region7: #{tpu_custom_call.1} parent=1 // pred_check_branch
      %12 = sbr.rel (0) target = $region9
    $region8: #{tpu_custom_call.1} parent=1 // pred_region
      _
    $region9: #{tpu_custom_call.1} parent=1 // pred_fallthru
      _
    // Predicated region
    $region10: #{tpu_custom_call.1} parent=1 // pred_check
      _
    $region11: #{tpu_custom_call.1} parent=1 // pred_check_branch
      %14 = sbr.rel (0) target = $region13
    $region12: #{tpu_custom_call.1} parent=1 // pred_region
      _
    $region13: #{tpu_custom_call.1} parent=1 // pred_fallthru
      _
    %p16 = scmp.eq.s32.totalorder 0, 0
    // Predicated region
    $region14: #{tpu_custom_call.1} parent=1 // pred_check
      %p17 = pneg %p16
    $region15: #{tpu_custom_call.1} parent=1 // pred_check_branch
      %19 = sbr.rel (%p17) target = $region17
    $region16: #{tpu_custom_call.1} parent=1 // pred_region
      %20 = vst [vmem:[#allocation2] sm:$0xff] 0.0
      %21 = vst [vmem:[#allocation2 + $0x8] sm:$0xff] 0.0
      %22 = vst [vmem:[#allocation2 + $0x10] sm:$0xff] 0.0
      %23 = vst [vmem:[#allocation2 + $0x18] sm:$0xff] 0.0
      %24 = vst [vmem:[#allocation2 + $0x20] sm:$0xff] 0.0
      %25 = vst [vmem:[#allocation2 + $0x28] sm:$0xff] 0.0
      %26 = vst [vmem:[#allocation2 + $0x30] sm:$0xff] 0.0
      %27 = vst [vmem:[#allocation2 + $0x38] sm:$0xff] 0.0
      %28 = vst [vmem:[#allocation2 + $0x40] sm:$0xff] 0.0
      %29 = vst [vmem:[#allocation2 + $0x48] sm:$0xff] 0.0
      %30 = vst [vmem:[#allocation2 + $0x50] sm:$0xff] 0.0
      %31 = vst [vmem:[#allocation2 + $0x58] sm:$0xff] 0.0
      %32 = vst [vmem:[#allocation2 + $0x60] sm:$0xff] 0.0
      %33 = vst [vmem:[#allocation2 + $0x68] sm:$0xff] 0.0
      %34 = vst [vmem:[#allocation2 + $0x70] sm:$0xff] 0.0
      %35 = vst [vmem:[#allocation2 + $0x78] sm:$0xff] 0.0
    $region17: #{tpu_custom_call.1} parent=1 // pred_fallthru
      _
    %v36 = vld [vmem:[#allocation2] sm:$0xff]
    %v37 = vld [vmem:[#allocation2 + $0x8] sm:$0xff]
    %v38 = vld [vmem:[#allocation2 + $0x10] sm:$0xff]
    %v39 = vld [vmem:[#allocation2 + $0x18] sm:$0xff]
    %v40 = vld [vmem:[#allocation2 + $0x20] sm:$0xff]
    %v41 = vld [vmem:[#allocation2 + $0x28] sm:$0xff]
    %v42 = vld [vmem:[#allocation2 + $0x30] sm:$0xff]
    %v43 = vld [vmem:[#allocation2 + $0x38] sm:$0xff]
    %v44 = vld [vmem:[#allocation2 + $0x40] sm:$0xff]
    %v45 = vld [vmem:[#allocation2 + $0x48] sm:$0xff]
    %v46 = vld [vmem:[#allocation2 + $0x50] sm:$0xff]
    %v47 = vld [vmem:[#allocation2 + $0x58] sm:$0xff]
    %v48 = vld [vmem:[#allocation2 + $0x60] sm:$0xff]
    %v49 = vld [vmem:[#allocation2 + $0x68] sm:$0xff]
    %v50 = vld [vmem:[#allocation2 + $0x70] sm:$0xff]
    %v51 = vld [vmem:[#allocation2 + $0x78] sm:$0xff]
    %v52 = vld [vmem:[%s0] sm:$0xf]
    %v53 = vld [vmem:[%s0 + $0x4] sm:$0xf]
    %v54 = vld [vmem:[%s0 + $0x8] sm:$0xf]
    %v55 = vld [vmem:[%s0 + $0xc] sm:$0xf]
    %v56 = vld [vmem:[%s0 + $0x10] sm:$0xf]
    %v57 = vld [vmem:[%s0 + $0x14] sm:$0xf]
    %v58 = vld [vmem:[%s0 + $0x18] sm:$0xf]
    %v59 = vld [vmem:[%s0 + $0x1c] sm:$0xf]
    %v60 = vld [vmem:[%s0 + $0x20] sm:$0xf]
    %v61 = vld [vmem:[%s0 + $0x24] sm:$0xf]
    %v62 = vld [vmem:[%s0 + $0x28] sm:$0xf]
    %v63 = vld [vmem:[%s0 + $0x2c] sm:$0xf]
    %v64 = vld [vmem:[%s0 + $0x30] sm:$0xf]
    %v65 = vld [vmem:[%s0 + $0x34] sm:$0xf]
    %v66 = vld [vmem:[%s0 + $0x38] sm:$0xf]
    %v67 = vld [vmem:[%s0 + $0x3c] sm:$0xf]
    %v68 = vld [vmem:[%s1] sm:$0xf]
    %v69 = vld [vmem:[%s1 + $0x4] sm:$0xf]
    %v70 = vld [vmem:[%s1 + $0x8] sm:$0xf]
    %v71 = vld [vmem:[%s1 + $0xc] sm:$0xf]
    %v72 = vld [vmem:[%s1 + $0x10] sm:$0xf]
    %v73 = vld [vmem:[%s1 + $0x14] sm:$0xf]
    %v74 = vld [vmem:[%s1 + $0x18] sm:$0xf]
    %v75 = vld [vmem:[%s1 + $0x1c] sm:$0xf]
    %v76 = vld [vmem:[%s1 + $0x20] sm:$0xf]
    %v77 = vld [vmem:[%s1 + $0x24] sm:$0xf]
    %v78 = vld [vmem:[%s1 + $0x28] sm:$0xf]
    %v79 = vld [vmem:[%s1 + $0x2c] sm:$0xf]
    %v80 = vld [vmem:[%s1 + $0x30] sm:$0xf]
    %v81 = vld [vmem:[%s1 + $0x34] sm:$0xf]
    %v82 = vld [vmem:[%s1 + $0x38] sm:$0xf]
    %v83 = vld [vmem:[%s1 + $0x3c] sm:$0xf]
    %v100 = vunpack.c.l.b16 %v52
    %v101 = vunpack.c.l.b16 %v53
    %v102 = vunpack.c.l.b16 %v54
    %v103 = vunpack.c.l.b16 %v55
    %v104 = vunpack.c.l.b16 %v56
    %v105 = vunpack.c.l.b16 %v57
    %v106 = vunpack.c.l.b16 %v58
    %v107 = vunpack.c.l.b16 %v59
    %v108 = vunpack.c.l.b16 %v60
    %v109 = vunpack.c.l.b16 %v61
    %v110 = vunpack.c.l.b16 %v62
    %v111 = vunpack.c.l.b16 %v63
    %v112 = vunpack.c.l.b16 %v64
    %v113 = vunpack.c.l.b16 %v65
    %v114 = vunpack.c.l.b16 %v66
    %v115 = vunpack.c.l.b16 %v67
    %v116 = vpack.c.b16 %v101, %v100
    %v117 = vpack.c.b16 %v103, %v102
    %v118 = vpack.c.b16 %v105, %v104
    %v119 = vpack.c.b16 %v107, %v106
    %v120 = vpack.c.b16 %v109, %v108
    %v121 = vpack.c.b16 %v111, %v110
    %v122 = vpack.c.b16 %v113, %v112
    %v123 = vpack.c.b16 %v115, %v114
    %v148 = vunpack.c.l.b16 %v68
    %v149 = vunpack.c.l.b16 %v69
    %v150 = vunpack.c.l.b16 %v70
    %v151 = vunpack.c.l.b16 %v71
    %v152 = vunpack.c.l.b16 %v72
    %v153 = vunpack.c.l.b16 %v73
    %v154 = vunpack.c.l.b16 %v74
    %v155 = vunpack.c.l.b16 %v75
    %v156 = vunpack.c.l.b16 %v76
    %v157 = vunpack.c.l.b16 %v77
    %v158 = vunpack.c.l.b16 %v78
    %v159 = vunpack.c.l.b16 %v79
    %v160 = vunpack.c.l.b16 %v80
    %v161 = vunpack.c.l.b16 %v81
    %v162 = vunpack.c.l.b16 %v82
    %v163 = vunpack.c.l.b16 %v83
    %v164 = vpack.c.b16 %v149, %v148
    %v165 = vpack.c.b16 %v151, %v150
    %v166 = vpack.c.b16 %v153, %v152
    %v167 = vpack.c.b16 %v155, %v154
    %v168 = vpack.c.b16 %v157, %v156
    %v169 = vpack.c.b16 %v159, %v158
    %v170 = vpack.c.b16 %v161, %v160
    %v171 = vpack.c.b16 %v163, %v162
    %180 = vmatprep.subr.bf16.mxu0 0
    %181 = vmatpush1.bf16.msra.mxu0 %v164
    %182 = vmatprep.subr.bf16.mxu0 0
    %183 = vmatpush1.bf16.msra.mxu0 %v165
    %184 = vmatprep.subr.bf16.mxu0 0
    %185 = vmatpush1.bf16.msra.mxu0 %v166
    %186 = vmatprep.subr.bf16.mxu0 0
    %187 = vmatpush1.bf16.msra.mxu0 %v167
    %188 = vmatprep.subr.bf16.mxu0 0
    %189 = vmatpush1.bf16.msra.mxu0 %v168
    %190 = vmatprep.subr.bf16.mxu0 0
    %191 = vmatpush1.bf16.msra.mxu0 %v169
    %192 = vmatprep.subr.bf16.mxu0 0
    %193 = vmatpush1.bf16.msra.mxu0 %v170
    %194 = vmatprep.subr.bf16.mxu0 0
    %195 = vmatpush1.bf16.msra.mxu0 %v171
    %196 = vmatprep.subr.bf16.mxu0 0
    %197 = vmatpush1.bf16.msra.mxu0 0
    %198 = vmatprep.subr.bf16.mxu0 0
    %199 = vmatpush1.bf16.msra.mxu0 0
    %200 = vmatprep.subr.bf16.mxu0 0
    %201 = vmatpush1.bf16.msra.mxu0 0
    %202 = vmatprep.subr.bf16.mxu0 0
    %203 = vmatpush1.bf16.msra.mxu0 0
    %204 = vmatprep.subr.bf16.mxu0 0
    %205 = vmatpush1.bf16.msra.mxu0 0
    %206 = vmatprep.subr.bf16.mxu0 0
    %207 = vmatpush1.bf16.msra.mxu0 0
    %208 = vmatprep.subr.bf16.mxu0 0
    %209 = vmatpush1.bf16.msra.mxu0 0
    %210 = vmatprep.subr.bf16.mxu0 0
    %211 = vmatpush1.bf16.msra.mxu0 0
    %212 = vmatprep.mubr.bf16.mxu0 0
    %213 = vmatmul.mubr.bf16.gmra.mrb[0].mxu0 %v116
    %v214 = vpop.f32.mrb[0].mxu0
    %v215 = vadd.f32 0.0, %v214
    %v216 = vpop.f32.mrb[0].mxu0
    %v217 = vpop.f32.mrb[0].mxu0
    %v218 = vadd.f32 0.0, %v217
    %v219 = vpop.f32.mrb[0].mxu0
    %220 = vmatprep.mubr.bf16.mxu0 0
    %221 = vmatmul.mubr.bf16.gmra.mrb[0].mxu0 %v117
    %v222 = vpop.f32.mrb[0].mxu0
    %v223 = vadd.f32 0.0, %v222
    %v224 = vpop.f32.mrb[0].mxu0
    %v225 = vpop.f32.mrb[0].mxu0
    %v226 = vadd.f32 0.0, %v225
    %v227 = vpop.f32.mrb[0].mxu0
    %228 = vmatprep.mubr.bf16.mxu0 0
    %229 = vmatmul.mubr.bf16.gmra.mrb[0].mxu0 %v118
    %v230 = vpop.f32.mrb[0].mxu0
    %v231 = vadd.f32 0.0, %v230
    %v232 = vpop.f32.mrb[0].mxu0
    %v233 = vpop.f32.mrb[0].mxu0
    %v234 = vadd.f32 0.0, %v233
    %v235 = vpop.f32.mrb[0].mxu0
    %236 = vmatprep.mubr.bf16.mxu0 0
    %237 = vmatmul.mubr.bf16.gmra.mrb[0].mxu0 %v119
    %v238 = vpop.f32.mrb[0].mxu0
    %v239 = vadd.f32 0.0, %v238
    %v240 = vpop.f32.mrb[0].mxu0
    %v241 = vpop.f32.mrb[0].mxu0
    %v242 = vadd.f32 0.0, %v241
    %v243 = vpop.f32.mrb[0].mxu0
    %244 = vmatprep.mubr.bf16.mxu0 0
    %245 = vmatmul.mubr.bf16.gmra.mrb[0].mxu0 %v120
    %v246 = vpop.f32.mrb[0].mxu0
    %v247 = vadd.f32 0.0, %v246
    %v248 = vpop.f32.mrb[0].mxu0
    %v249 = vpop.f32.mrb[0].mxu0
    %v250 = vadd.f32 0.0, %v249
    %v251 = vpop.f32.mrb[0].mxu0
    %252 = vmatprep.mubr.bf16.mxu0 0
    %253 = vmatmul.mubr.bf16.gmra.mrb[0].mxu0 %v121
    %v254 = vpop.f32.mrb[0].mxu0
    %v255 = vadd.f32 0.0, %v254
    %v256 = vpop.f32.mrb[0].mxu0
    %v257 = vpop.f32.mrb[0].mxu0
    %v258 = vadd.f32 0.0, %v257
    %v259 = vpop.f32.mrb[0].mxu0
    %260 = vmatprep.mubr.bf16.mxu0 0
    %261 = vmatmul.mubr.bf16.gmra.mrb[0].mxu0 %v122
    %v262 = vpop.f32.mrb[0].mxu0
    %v263 = vadd.f32 0.0, %v262
    %v264 = vpop.f32.mrb[0].mxu0
    %v265 = vpop.f32.mrb[0].mxu0
    %v266 = vadd.f32 0.0, %v265
    %v267 = vpop.f32.mrb[0].mxu0
    %268 = vmatprep.mubr.bf16.mxu0 0
    %269 = vmatmul.mubr.bf16.gmra.mrb[0].mxu0 %v123
    %v270 = vpop.f32.mrb[0].mxu0
    %v271 = vadd.f32 0.0, %v270
    %v272 = vpop.f32.mrb[0].mxu0
    %v273 = vpop.f32.mrb[0].mxu0
    %v274 = vadd.f32 0.0, %v273
    %v275 = vpop.f32.mrb[0].mxu0
    %276 = vdwg.mxu0
    %v277 = vadd.f32 %v36, %v215
    %v278 = vadd.f32 %v37, %v218
    %v279 = vadd.f32 %v38, %v223
    %v280 = vadd.f32 %v39, %v226
    %v281 = vadd.f32 %v40, %v231
    %v282 = vadd.f32 %v41, %v234
    %v283 = vadd.f32 %v42, %v239
    %v284 = vadd.f32 %v43, %v242
    %v285 = vadd.f32 %v44, %v247
    %v286 = vadd.f32 %v45, %v250
    %v287 = vadd.f32 %v46, %v255
    %v288 = vadd.f32 %v47, %v258
    %v289 = vadd.f32 %v48, %v263
    %v290 = vadd.f32 %v49, %v266
    %v291 = vadd.f32 %v50, %v271
    %v292 = vadd.f32 %v51, %v274
    %293 = vst [vmem:[#allocation2] sm:$0xff] %v277
    %294 = vst [vmem:[#allocation2 + $0x8] sm:$0xff] %v278
    %295 = vst [vmem:[#allocation2 + $0x10] sm:$0xff] %v279
    %296 = vst [vmem:[#allocation2 + $0x18] sm:$0xff] %v280
    %297 = vst [vmem:[#allocation2 + $0x20] sm:$0xff] %v281
    %298 = vst [vmem:[#allocation2 + $0x28] sm:$0xff] %v282
    %299 = vst [vmem:[#allocation2 + $0x30] sm:$0xff] %v283
    %300 = vst [vmem:[#allocation2 + $0x38] sm:$0xff] %v284
    %301 = vst [vmem:[#allocation2 + $0x40] sm:$0xff] %v285
    %302 = vst [vmem:[#allocation2 + $0x48] sm:$0xff] %v286
    %303 = vst [vmem:[#allocation2 + $0x50] sm:$0xff] %v287
    %304 = vst [vmem:[#allocation2 + $0x58] sm:$0xff] %v288
    %305 = vst [vmem:[#allocation2 + $0x60] sm:$0xff] %v289
    %306 = vst [vmem:[#allocation2 + $0x68] sm:$0xff] %v290
    %307 = vst [vmem:[#allocation2 + $0x70] sm:$0xff] %v291
    %308 = vst [vmem:[#allocation2 + $0x78] sm:$0xff] %v292
    // Predicated region
    $region18: #{tpu_custom_call.1} parent=1 // pred_check
      %p309 = pneg %p16
    $region19: #{tpu_custom_call.1} parent=1 // pred_check_branch
      %311 = sbr.rel (%p309) target = $region21
    $region20: #{tpu_custom_call.1} parent=1 // pred_region
      %v312 = vld [vmem:[#allocation2] sm:$0xff]
      %v313 = vld [vmem:[#allocation2 + $0x8] sm:$0xff]
      %v314 = vld [vmem:[#allocation2 + $0x10] sm:$0xff]
      %v315 = vld [vmem:[#allocation2 + $0x18] sm:$0xff]
      %v316 = vld [vmem:[#allocation2 + $0x20] sm:$0xff]
      %v317 = vld [vmem:[#allocation2 + $0x28] sm:$0xff]
      %v318 = vld [vmem:[#allocation2 + $0x30] sm:$0xff]
      %v319 = vld [vmem:[#allocation2 + $0x38] sm:$0xff]
      %v320 = vld [vmem:[#allocation2 + $0x40] sm:$0xff]
      %v321 = vld [vmem:[#allocation2 + $0x48] sm:$0xff]
      %v322 = vld [vmem:[#allocation2 + $0x50] sm:$0xff]
      %v323 = vld [vmem:[#allocation2 + $0x58] sm:$0xff]
      %v324 = vld [vmem:[#allocation2 + $0x60] sm:$0xff]
      %v325 = vld [vmem:[#allocation2 + $0x68] sm:$0xff]
      %v326 = vld [vmem:[#allocation2 + $0x70] sm:$0xff]
      %v327 = vld [vmem:[#allocation2 + $0x78] sm:$0xff]
      %v328 = vld [vmem:[%s2] sm:$0xff]
      %v329 = vld [vmem:[%s2 + $0x8] sm:$0xff]
      %v330 = vld [vmem:[%s2 + $0x10] sm:$0xff]
      %v331 = vld [vmem:[%s2 + $0x18] sm:$0xff]
      %v332 = vld [vmem:[%s2 + $0x20] sm:$0xff]
      %v333 = vld [vmem:[%s2 + $0x28] sm:$0xff]
      %v334 = vld [vmem:[%s2 + $0x30] sm:$0xff]
      %v335 = vld [vmem:[%s2 + $0x38] sm:$0xff]
      %v336 = vld [vmem:[%s2 + $0x40] sm:$0xff]
      %v337 = vld [vmem:[%s2 + $0x48] sm:$0xff]
      %v338 = vld [vmem:[%s2 + $0x50] sm:$0xff]
      %v339 = vld [vmem:[%s2 + $0x58] sm:$0xff]
      %v340 = vld [vmem:[%s2 + $0x60] sm:$0xff]
      %v341 = vld [vmem:[%s2 + $0x68] sm:$0xff]
      %v342 = vld [vmem:[%s2 + $0x70] sm:$0xff]
      %v343 = vld [vmem:[%s2 + $0x78] sm:$0xff]
      %345 = vset.pattern.permute.xlu0 0
      %346 = vperm.xlu0 %345, %v328
      %v347 = vpop.permute.xlu0 %346
      %350 = vset.pattern.permute.xlu0 0
      %351 = vperm.xlu0 %350, %v329
      %v352 = vpop.permute.xlu0 %351
      %355 = vset.pattern.permute.xlu0 0
      %356 = vperm.xlu0 %355, %v330
      %v357 = vpop.permute.xlu0 %356
      %360 = vset.pattern.permute.xlu0 0
      %361 = vperm.xlu0 %360, %v331
      %v362 = vpop.permute.xlu0 %361
      %365 = vset.pattern.permute.xlu0 0
      %366 = vperm.xlu0 %365, %v332
      %v367 = vpop.permute.xlu0 %366
      %370 = vset.pattern.permute.xlu0 0
      %371 = vperm.xlu0 %370, %v333
      %v372 = vpop.permute.xlu0 %371
      %375 = vset.pattern.permute.xlu0 0
      %376 = vperm.xlu0 %375, %v334
      %v377 = vpop.permute.xlu0 %376
      %380 = vset.pattern.permute.xlu0 0
      %381 = vperm.xlu0 %380, %v335
      %v382 = vpop.permute.xlu0 %381
      %385 = vset.pattern.permute.xlu0 0
      %386 = vperm.xlu0 %385, %v336
      %v387 = vpop.permute.xlu0 %386
      %390 = vset.pattern.permute.xlu0 0
      %391 = vperm.xlu0 %390, %v337
      %v392 = vpop.permute.xlu0 %391
      %395 = vset.pattern.permute.xlu0 0
      %396 = vperm.xlu0 %395, %v338
      %v397 = vpop.permute.xlu0 %396
      %400 = vset.pattern.permute.xlu0 0
      %401 = vperm.xlu0 %400, %v339
      %v402 = vpop.permute.xlu0 %401
      %405 = vset.pattern.permute.xlu0 0
      %406 = vperm.xlu0 %405, %v340
      %v407 = vpop.permute.xlu0 %406
      %410 = vset.pattern.permute.xlu0 0
      %411 = vperm.xlu0 %410, %v341
      %v412 = vpop.permute.xlu0 %411
      %415 = vset.pattern.permute.xlu0 0
      %416 = vperm.xlu0 %415, %v342
      %v417 = vpop.permute.xlu0 %416
      %420 = vset.pattern.permute.xlu0 0
      %421 = vperm.xlu0 %420, %v343
      %v422 = vpop.permute.xlu0 %421
      %v424 = vmul.f32 %v312, %v347
      %v425 = vmul.f32 %v313, %v352
      %v426 = vmul.f32 %v314, %v357
      %v427 = vmul.f32 %v315, %v362
      %v428 = vmul.f32 %v316, %v367
      %v429 = vmul.f32 %v317, %v372
      %v430 = vmul.f32 %v318, %v377
      %v431 = vmul.f32 %v319, %v382
      %v432 = vmul.f32 %v320, %v387
      %v433 = vmul.f32 %v321, %v392
      %v434 = vmul.f32 %v322, %v397
      %v435 = vmul.f32 %v323, %v402
      %v436 = vmul.f32 %v324, %v407
      %v437 = vmul.f32 %v325, %v412
      %v438 = vmul.f32 %v326, %v417
      %v439 = vmul.f32 %v327, %v422
      %v440 = vpack.c.bf16 %v425, %v424
      %v441 = vpack.c.bf16 %v427, %v426
      %v442 = vpack.c.bf16 %v429, %v428
      %v443 = vpack.c.bf16 %v431, %v430
      %v444 = vpack.c.bf16 %v433, %v432
      %v445 = vpack.c.bf16 %v435, %v434
      %v446 = vpack.c.bf16 %v437, %v436
      %v447 = vpack.c.bf16 %v439, %v438
      %v456 = vunpack.c.l.b16 %v440
      %v457 = vunpack.c.h.b16 %v440
      %v458 = vunpack.c.l.b16 %v441
      %v459 = vunpack.c.h.b16 %v441
      %v460 = vunpack.c.l.b16 %v442
      %v461 = vunpack.c.h.b16 %v442
      %v462 = vunpack.c.l.b16 %v443
      %v463 = vunpack.c.h.b16 %v443
      %v464 = vunpack.c.l.b16 %v444
      %v465 = vunpack.c.h.b16 %v444
      %v466 = vunpack.c.l.b16 %v445
      %v467 = vunpack.c.h.b16 %v445
      %v468 = vunpack.c.l.b16 %v446
      %v469 = vunpack.c.h.b16 %v446
      %v470 = vunpack.c.l.b16 %v447
      %v471 = vunpack.c.h.b16 %v447
      %v472 = vpack.c.b16 %v456, %v456
      %v473 = vpack.c.b16 %v457, %v457
      %v474 = vpack.c.b16 %v458, %v458
      %v475 = vpack.c.b16 %v459, %v459
      %v476 = vpack.c.b16 %v460, %v460
      %v477 = vpack.c.b16 %v461, %v461
      %v478 = vpack.c.b16 %v462, %v462
      %v479 = vpack.c.b16 %v463, %v463
      %v480 = vpack.c.b16 %v464, %v464
      %v481 = vpack.c.b16 %v465, %v465
      %v482 = vpack.c.b16 %v466, %v466
      %v483 = vpack.c.b16 %v467, %v467
      %v484 = vpack.c.b16 %v468, %v468
      %v485 = vpack.c.b16 %v469, %v469
      %v486 = vpack.c.b16 %v470, %v470
      %v487 = vpack.c.b16 %v471, %v471
      %504 = vst [vmem:[#allocation3] sm:$0xf] %v472
      %505 = vst [vmem:[#allocation3 + $0x4] sm:$0xf] %v473
      %506 = vst [vmem:[#allocation3 + $0x8] sm:$0xf] %v474
      %507 = vst [vmem:[#allocation3 + $0xc] sm:$0xf] %v475
      %508 = vst [vmem:[#allocation3 + $0x10] sm:$0xf] %v476
      %509 = vst [vmem:[#allocation3 + $0x14] sm:$0xf] %v477
      %510 = vst [vmem:[#allocation3 + $0x18] sm:$0xf] %v478
      %511 = vst [vmem:[#allocation3 + $0x1c] sm:$0xf] %v479
      %512 = vst [vmem:[#allocation3 + $0x20] sm:$0xf] %v480
      %513 = vst [vmem:[#allocation3 + $0x24] sm:$0xf] %v481
      %514 = vst [vmem:[#allocation3 + $0x28] sm:$0xf] %v482
      %515 = vst [vmem:[#allocation3 + $0x2c] sm:$0xf] %v483
      %516 = vst [vmem:[#allocation3 + $0x30] sm:$0xf] %v484
      %517 = vst [vmem:[#allocation3 + $0x34] sm:$0xf] %v485
      %518 = vst [vmem:[#allocation3 + $0x38] sm:$0xf] %v486
      %519 = vst [vmem:[#allocation3 + $0x3c] sm:$0xf] %v487
    $region21: #{tpu_custom_call.1} parent=1 // pred_fallthru
      _
    // Predicated region
    $region22: #{tpu_custom_call.1} parent=1 // pred_check
      _
    $region23: #{tpu_custom_call.1} parent=1 // pred_check_branch
      %521 = sbr.rel (0) target = $region25
    $region24: #{tpu_custom_call.1} parent=1 // pred_region
      %s523 = ssub.s32 1024, 1024
      %524 = vsyncadd [#allocation4], %s523
      %s525 = sshll.u32 [#allocation3], 4
      %s526 = int_to_ptr.vmem [resolvable:$true] %s525
      %531 = dma.vmem_to_hbm [thread:$0]  %s526, 1024, %s3, [#allocation4], 64, 64, 4
    $region25: #{tpu_custom_call.1} parent=1 // pred_fallthru
      _
    // Predicated region
    $region26: #{tpu_custom_call.1} parent=1 // pred_check
      _
    $region27: #{tpu_custom_call.1} parent=1 // pred_check_branch
      %533 = sbr.rel (0) target = $region29
    $region28: #{tpu_custom_call.1} parent=1 // pred_region
      %534 = dma.done [#allocation4], 1024
    $region29: #{tpu_custom_call.1} parent=1 // pred_fallthru
      _
    %535 = vsyncpa [#allocation4], 1

</llo_original>
